<compile_context>
chip_gen: v6e
topology: v6e:2x2x1
jax: 0.10.0
libtpu: 0.0.40
codegen_flags: <defaults>
</compile_context>

<pallas_src>
import functools
import math

import jax
import jax.numpy as jnp
from jax.experimental import pallas as pl
from jax.experimental.pallas import tpu as pltpu


def _aug_kernel(off_ref, params_ref, wh_ref, ww_ref, x_ref, o_ref, *, f, c):
    """Resized-crop + flip + photometric for ONE frame per grid step.

    off_ref    : SMEM (1,) i32   temporal-crop offset (consumed by index_maps)
    params_ref : SMEM (2,) f32   [1 - contrast, brightness]
    wh_ref     : VMEM (F+1, H0)  bf16  contrast*H-interp rows; row F = column sums
    ww_ref     : VMEM (W0*C,F*C) bf16  block-diag (channel-preserving) W-interp, flip folded
    x_ref      : VMEM (1, H0, W0*C) f32   one source frame (THWC flattened, lane-dense)
    o_ref      : VMEM (1, F,  F*C)        one output frame
    """
    del off_ref  # only used by the index_maps
    omc = params_ref[0]          # 1 - contrast
    brightness = params_ref[1]
    inv_n = 1.0 / float(f * f * c)

    # Cast in-kernel (saves the wrapper-side cast pass over HBM).
    x = x_ref[0].astype(jnp.bfloat16)                                    # (H0, W0*C)

    # H-resize (contrast pre-folded) + column-sum row, canonical MXU matmul.
    z_ext = jnp.dot(wh_ref[...], x, preferred_element_type=jnp.float32)  # (F+1, W0*C)

    # W-resize (+ horizontal flip folded), channel-block-diagonal matrix.
    o_ext = jnp.dot(z_ext.astype(jnp.bfloat16), ww_ref[...],
                    preferred_element_type=jnp.float32)                  # (F+1, F*C)

    z = o_ext[:f, :]                                                     # contrast * resized frame
    mean = jnp.sum(o_ext[f]) * inv_n                                     # un-contrasted frame mean
    bias = mean * omc + brightness
    # TODO(synk): torchvision uses a luma-weighted grayscale mean for contrast; this
    # stand-in pivots on the unweighted RGB mean.
    o_ref[0] = jnp.clip(z + bias, 0.0, 1.0).astype(o_ref.dtype)


def _interp_matrix(offset, crop_len, src_len, out_len):
    """Bilinear interpolation matrix (out_len, src_len) resampling the crop window
    [offset, offset + crop_len) of the source axis to out_len samples
    (align_corners=False; coordinates clamped to the crop window)."""
    pos = offset + (jnp.arange(out_len, dtype=jnp.float32) + 0.5) * crop_len / out_len - 0.5
    pos = jnp.clip(pos, offset, offset + crop_len - 1.0)      # replicate at crop borders
    pos = jnp.clip(pos, 0.0, float(src_len) - 1.0)            # stay inside the source
    idx = jnp.arange(src_len, dtype=jnp.float32)[None, :]
    return jnp.maximum(0.0, 1.0 - jnp.abs(idx - pos[:, None]))
    # TODO(synk): antialiased bilinear resize for strong downscales not modeled.


def _sample_resized_crop(key, h0, w0, scale=(0.5, 1.0), ratio=(3.0 / 4.0, 4.0 / 3.0)):
    """torchvision RandomResizedCrop.get_params: 10 attempts + ratio-clamped fallback."""
    k_s, k_r, k_t, k_l = jax.random.split(key, 4)
    n = 10
    area = float(h0 * w0)
    scl = jax.random.uniform(k_s, (n,), minval=scale[0], maxval=scale[1])
    logr = jax.random.uniform(k_r, (n,), minval=math.log(ratio[0]), maxval=math.log(ratio[1]))
    asp = jnp.exp(logr)
    target_area = scl * area
    ws = jnp.round(jnp.sqrt(target_area * asp))
    hs = jnp.round(jnp.sqrt(target_area / asp))
    valid = (ws > 0) & (ws <= w0) & (hs > 0) & (hs <= h0)
    any_valid = jnp.any(valid)
    idx = jnp.argmax(valid)  # first valid attempt
    in_ratio = float(w0) / float(h0)
    if in_ratio < ratio[0]:
        fb_w, fb_h = float(w0), float(round(w0 / ratio[0]))
    elif in_ratio > ratio[1]:
        fb_h, fb_w = float(h0), float(round(h0 * ratio[1]))
    else:
        fb_w, fb_h = float(w0), float(h0)
    w = jnp.clip(jnp.where(any_valid, ws[idx], fb_w), 1.0, float(w0))
    h = jnp.clip(jnp.where(any_valid, hs[idx], fb_h), 1.0, float(h0))
    top = jnp.floor(jax.random.uniform(k_t, ()) * (float(h0) - h + 1.0))
    left = jnp.floor(jax.random.uniform(k_l, ()) * (float(w0) - w + 1.0))
    return top, left, h, w


class StrongAugmentationsPallas:
    def __init__(self, frame_sz=224, window_sz=32, augmentations='GT,FT,TT,ViV',
                 n_raug=2, m_raug=9, out_dtype=jnp.bfloat16, key=None):
        self.frame_sz = frame_sz
        self.window_sz = window_sz
        self.global_transformations = 'GT' in augmentations
        self.frame_transformations = 'FT' in augmentations
        self.temporal_transformations = 'TT' in augmentations
        self.video_in_video = 'ViV' in augmentations
        self.n_raug = n_raug
        self.m_raug = m_raug
        self.out_dtype = out_dtype  # bf16 default halves the output HBM stream; use f32 to match torch
        self._key = key if key is not None else jax.random.PRNGKey(0)

    # ------------------------------------------------------------------ helpers
    def _prep(self, video):
        """random_temporal_crop doubling glue (rare path: only when T0 < window_sz)."""
        while video.shape[0] < self.window_sz:
            video = jnp.concatenate([video, video], axis=0)
        return video

    def _draw(self, key, video_shape):
        """Per-call random parameters (temporal offset, crop, flip, photometric)."""
        T0, H0, W0, _ = video_shape
        k_off, k_rrc, k_flip, k_con, k_bri = jax.random.split(key, 5)
        # np.random.randint(max(T0 - window_sz, 1)) -> exclusive high
        max_off = max(T0 - self.window_sz, 1)
        off = jax.random.randint(k_off, (1,), 0, max_off, dtype=jnp.int32)
        top, left, crop_h, crop_w = _sample_resized_crop(k_rrc, H0, W0)
        wh = _interp_matrix(top, crop_h, H0, self.frame_sz)    # (F, H0)
        ww = _interp_matrix(left, crop_w, W0, self.frame_sz)   # (F, W0)
        flip = jax.random.uniform(k_flip, ()) < 0.5
        ww = jnp.where(flip, ww[::-1, :], ww)                  # RandomHorizontalFlip folded
        # Photometric stand-in for RandAugment / FrameTransforms:
        # contrast about the frame mean + brightness, clipped to [0, 1].
        # TODO(synk): full RandAugment op set (shear/rotate/posterize/solarize/...)
        # and FrameTransforms (random overlay, Gaussian blur) are not translated.
        contrast = jax.random.uniform(k_con, (), minval=0.8, maxval=1.2)
        brightness = jax.random.uniform(k_bri, (), minval=-0.1, maxval=0.1)
        return off, wh, ww, contrast, brightness

    # ------------------------------------------------------------------ forward
    def __call__(self, video, key=None):
        if key is None:
            self._key, key = jax.random.split(self._key)
        # TODO(synk): TemporalTransformations (speed-up/slow-motion/reverse/pause/shuffle)
        # need dynamic-length temporal resampling; no clean static-shape Pallas port.
        # TODO(synk): VideoInVideo mixup acts across clips via self.mixup, not in forward.
        video = self._prep(video)
        T0, H0, W0, C = video.shape
        T, F = self.window_sz, self.frame_sz

        off, wh, ww, contrast, brightness = self._draw(key, video.shape)

        # Contrast folded into the data rows; unscaled column-sum row -> mean falls
        # out of the same matmul (no full-frame XLU reduce, no extra VPU ops).
        wh_ext = jnp.concatenate([wh * contrast, jnp.sum(wh, axis=0, keepdims=True)],
                                 axis=0).astype(jnp.bfloat16)                       # (F+1, H0)
        # Channel-preserving block-diagonal W matrix keeps frames in THWC (lane-dense).
        ww_blk = jnp.kron(ww.T, jnp.eye(C, dtype=ww.dtype)).astype(jnp.bfloat16)    # (W0*C, F*C)

        params = jnp.stack([1.0 - contrast, brightness]).astype(jnp.float32)

        # THWC -> lane-dense 3-D slab; contiguous reshape is free. Stays f32 in HBM:
        # the temporal slice and the bf16 cast both happen inside the kernel.
        x3d = video.reshape(T0, H0, W0 * C)

        out_itemsize = jnp.dtype(self.out_dtype).itemsize
        # Derived VMEM budget: double-buffered blocks + resident matrices + intermediates.
        blk_in = H0 * W0 * C * 4
        blk_out = F * F * C * out_itemsize
        w_bytes = ((F + 1) * H0 + (W0 * C) * (F * C)) * 2
        tmp = (F + 1) * (W0 * C) * 6 + (F + 1) * (F * C) * 4 + H0 * W0 * C * 2 + F * F * C * 8
        need = 2 * blk_in + 2 * blk_out + 2 * w_bytes + tmp
        vmem_limit = int(min(60 * 2**20, max(32 * 2**20, 2 * need)))

        cost = pl.CostEstimate(
            flops=int(2 * T * (F + 1) * H0 * (W0 * C) + 2 * T * (F + 1) * (W0 * C) * (F * C)),
            transcendentals=0,
            bytes_accessed=int(T * H0 * W0 * C * 4 + T * F * F * C * out_itemsize + w_bytes),
        )

        kernel = functools.partial(_aug_kernel, f=F, c=C)

        out3d = pl.pallas_call(
            kernel,
            out_shape=jax.ShapeDtypeStruct((T, F, F * C), self.out_dtype),
            grid_spec=pltpu.PrefetchScalarGridSpec(
                num_scalar_prefetch=1,                                   # off -> SMEM, seen by index_maps
                grid=(T,),                                               # one frame per step (megacore-friendly)
                in_specs=[
                    pl.BlockSpec(memory_space=pltpu.MemorySpace.SMEM),   # params (scalars)
                    pl.BlockSpec((F + 1, H0), lambda i, off: (0, 0)),    # wh_ext (grid-invariant)
                    pl.BlockSpec((W0 * C, F * C), lambda i, off: (0, 0)),# ww_blk (grid-invariant)
                    # Temporal crop folded in: frame-granular index = off + i.
                    pl.BlockSpec((1, H0, W0 * C), lambda i, off: (off[0] + i, 0, 0)),
                ],
                out_specs=pl.BlockSpec((1, F, F * C), lambda i, off: (i, 0, 0)),
            ),
            compiler_params=pltpu.CompilerParams(
                dimension_semantics=("parallel",),
                vmem_limit_bytes=vmem_limit,
            ),
            cost_estimate=cost,
        )(off, params, wh_ext, ww_blk, x3d)

        # Back to THWC; contiguous reshape is free.
        return out3d.reshape(T, F, F, C)

    # ------------------------------------------------------------------ pure-JAX reference (f32)
    def reference(self, video, key):
        video = self._prep(video)
        T, F = self.window_sz, self.frame_sz
        off, wh, ww, contrast, brightness = self._draw(key, video.shape)
        v = jax.lax.dynamic_slice_in_dim(video, off[0], T, axis=0)        # (T, H0, W0, C)
        r = jnp.einsum('fh,thwc->tfwc', wh, v)                            # H-resize
        r = jnp.einsum('gw,tfwc->tfgc', ww, r)                            # W-resize (+flip)
        mean = jnp.mean(r, axis=(1, 2, 3), keepdims=True)
        return jnp.clip((r - mean) * contrast + mean + brightness, 0.0, 1.0)


if __name__ == "__main__":
    key = jax.random.PRNGKey(0)
    k_vid, k_aug = jax.random.split(key)

    # Small shapes: input clip THWC = (12, 24, 32, 3); temporal-crop to window_sz=8
    # frames, resized-crop each frame to frame_sz=16.  Correctness-only shapes.
    T0, H0, W0, C = 12, 24, 32, 3
    frame_sz, window_sz = 16, 8

    video = jax.random.uniform(k_vid, (T0, H0, W0, C), dtype=jnp.float32)

    aug = StrongAugmentationsPallas(frame_sz=frame_sz, window_sz=window_sz)
    out = jax.block_until_ready(aug(video, key=k_aug))

    assert out.shape == (window_sz, frame_sz, frame_sz, C), out.shape
    assert out.dtype == jnp.bfloat16, out.dtype
    out_f32 = out.astype(jnp.float32)
    assert bool(jnp.all(jnp.isfinite(out_f32)))
    assert bool(jnp.all((out_f32 >= 0.0) & (out_f32 <= 1.0)))

    # Compare against the pure-JAX f32 reference using the same random draws
    # (bf16 weights/data + f32 accumulation -> small quantization error).
    ref = jax.block_until_ready(aug.reference(video, key=k_aug))
    max_err = float(jnp.max(jnp.abs(out_f32 - ref)))
    assert max_err < 0.05, f"max abs error vs reference: {max_err}"

    print("KERNEL_OK")
</pallas_src>

<mosaic_0001>
module attributes {stable_mosaic.version = 11 : i64} {
  func.func @_aug_kernel(%arg0: i32, %arg1: memref<1xi32, #tpu.memory_space<smem>>, %arg2: memref<2xf32, #tpu.memory_space<smem>>, %arg3: memref<17x24xbf16, #tpu.memory_space<vmem>>, %arg4: memref<96x48xbf16, #tpu.memory_space<vmem>>, %arg5: memref<1x24x96xf32, #tpu.memory_space<vmem>>, %arg6: memref<1x16x48xbf16, #tpu.memory_space<vmem>>) attributes {dimension_semantics = [#tpu.dimension_semantics<parallel>], iteration_bounds = array<i64: 8>, scalar_prefetch = 1 : i64, scratch_operands = 0 : i64, tpu.core_type = #tpu.core_type<tc>, window_params = [{transform_indices = @transform_0, window_bounds = array<i64: 2>}, {pipeline_mode = #tpu.pipeline_mode<synchronous>, transform_indices = @transform_1, window_bounds = array<i64: 17, 24>}, {pipeline_mode = #tpu.pipeline_mode<synchronous>, transform_indices = @transform_2, window_bounds = array<i64: 96, 48>}, {transform_indices = @transform_3, window_bounds = array<i64: 1, 24, 96>}, {transform_indices = @transform_4, window_bounds = array<i64: 1, 16, 48>}]} {
    %c0 = arith.constant 0 : index
    %0 = memref.load %arg2[%c0] : memref<2xf32, #tpu.memory_space<smem>>
    %c1 = arith.constant 1 : index
    %1 = memref.load %arg2[%c1] : memref<2xf32, #tpu.memory_space<smem>>
    %c0_0 = arith.constant 0 : index
    %c0_1 = arith.constant 0 : index
    %c0_2 = arith.constant 0 : index
    %2 = vector.load %arg5[%c0_0, %c0_1, %c0_2] : memref<1x24x96xf32, #tpu.memory_space<vmem>>, vector<1x24x96xf32>
    %3 = vector.shape_cast %2 : vector<1x24x96xf32> to vector<24x96xf32>
    %4 = arith.truncf %3 : vector<24x96xf32> to vector<24x96xbf16>
    %c0_3 = arith.constant 0 : index
    %c0_4 = arith.constant 0 : index
    %5 = vector.load %arg3[%c0_3, %c0_4] : memref<17x24xbf16, #tpu.memory_space<vmem>>, vector<17x24xbf16>
    %cst = arith.constant dense<0.000000e+00> : vector<17x96xf32>
    %6 = tpu.matmul %5, %4, %cst {dimension_numbers = #tpu.dot_dimension_numbers<[1], [0], [0], [1], [0, 0, 1, 1], [], []>} : vector<17x24xbf16>, vector<24x96xbf16>, vector<17x96xf32> -> vector<17x96xf32>
    %7 = arith.truncf %6 : vector<17x96xf32> to vector<17x96xbf16>
    %c0_5 = arith.constant 0 : index
    %c0_6 = arith.constant 0 : index
    %8 = vector.load %arg4[%c0_5, %c0_6] : memref<96x48xbf16, #tpu.memory_space<vmem>>, vector<96x48xbf16>
    %cst_7 = arith.constant dense<0.000000e+00> : vector<17x48xf32>
    %9 = tpu.matmul %7, %8, %cst_7 {dimension_numbers = #tpu.dot_dimension_numbers<[1], [0], [0], [1], [0, 0, 1, 1], [], []>} : vector<17x96xbf16>, vector<96x48xbf16>, vector<17x48xf32> -> vector<17x48xf32>
    %10 = vector.extract_strided_slice %9 {offsets = [0, 0], sizes = [16, 48], strides = [1, 1]} : vector<17x48xf32> to vector<16x48xf32>
    %11 = vector.extract_strided_slice %9 {offsets = [16, 0], sizes = [1, 48], strides = [1, 1]} : vector<17x48xf32> to vector<1x48xf32>
    %12 = vector.shape_cast %11 : vector<1x48xf32> to vector<48xf32>
    %13 = vector.shape_cast %12 : vector<48xf32> to vector<1x48xf32>
    %cst_8 = arith.constant dense<0.000000e+00> : vector<1xf32>
    %14 = vector.multi_reduction <add>, %13, %cst_8 [1] : vector<1x48xf32> to vector<1xf32>
    %15 = vector.shape_cast %14 : vector<1xf32> to vector<1x1xf32>
    %16 = vector.extract %15[0, 0] : f32 from vector<1x1xf32>
    %cst_9 = arith.constant 0.00130208337 : f32
    %17 = arith.mulf %16, %cst_9 : f32
    %18 = arith.mulf %17, %0 : f32
    %19 = arith.addf %18, %1 : f32
    %20 = vector.broadcast %19 : f32 to vector<16x48xf32>
    %21 = arith.addf %10, %20 : vector<16x48xf32>
    %cst_10 = arith.constant 0.000000e+00 : f32
    %cst_11 = arith.constant 1.000000e+00 : f32
    %22 = vector.broadcast %cst_10 : f32 to vector<16x48xf32>
    %23 = arith.maximumf %22, %21 : vector<16x48xf32>
    %24 = vector.broadcast %cst_11 : f32 to vector<16x48xf32>
    %25 = arith.minimumf %24, %23 : vector<16x48xf32>
    %26 = arith.truncf %25 : vector<16x48xf32> to vector<16x48xbf16>
    %c0_12 = arith.constant 0 : index
    %c0_13 = arith.constant 0 : index
    %c0_14 = arith.constant 0 : index
    %27 = vector.load %arg6[%c0_12, %c0_13, %c0_14] : memref<1x16x48xbf16, #tpu.memory_space<vmem>>, vector<1x16x48xbf16>
    %28 = vector.shape_cast %27 : vector<1x16x48xbf16> to vector<16x48xbf16>
    %29 = vector.shape_cast %26 : vector<16x48xbf16> to vector<1x16x48xbf16>
    tpu.vector_store %arg6[%c0_12, %c0_13, %c0_14], %29 {strides = array<i32>} : memref<1x16x48xbf16, #tpu.memory_space<vmem>>, vector<1x16x48xbf16>,
    return
  }
  func.func @transform_0(%arg0: i32, %arg1: memref<1xi32, #tpu.memory_space<smem>>) -> i32 {
    %c0_i32 = arith.constant 0 : i32
    %c0_i32_0 = arith.constant 0 : i32
    return %c0_i32 : i32
  }
  func.func @transform_1(%arg0: i32, %arg1: memref<1xi32, #tpu.memory_space<smem>>) -> (i32, i32) {
    %c0_i32 = arith.constant 0 : i32
    %c0_i32_0 = arith.constant 0 : i32
    %c0_i32_1 = arith.constant 0 : i32
    return %c0_i32, %c0_i32_0 : i32, i32
  }
  func.func @transform_2(%arg0: i32, %arg1: memref<1xi32, #tpu.memory_space<smem>>) -> (i32, i32) {
    %c0_i32 = arith.constant 0 : i32
    %c0_i32_0 = arith.constant 0 : i32
    %c0_i32_1 = arith.constant 0 : i32
    return %c0_i32, %c0_i32_0 : i32, i32
  }
  func.func @transform_3(%arg0: i32, %arg1: memref<1xi32, #tpu.memory_space<smem>>) -> (i32, i32, i32) {
    %c0 = arith.constant 0 : index
    %0 = memref.load %arg1[%c0] : memref<1xi32, #tpu.memory_space<smem>>
    %1 = arith.addi %0, %arg0 : i32
    %c0_i32 = arith.constant 0 : i32
    %c0_i32_0 = arith.constant 0 : i32
    %c0_i32_1 = arith.constant 0 : i32
    return %1, %c0_i32, %c0_i32_0 : i32, i32, i32
  }
  func.func @transform_4(%arg0: i32, %arg1: memref<1xi32, #tpu.memory_space<smem>>) -> (i32, i32, i32) {
    %c0_i32 = arith.constant 0 : i32
    %c0_i32_0 = arith.constant 0 : i32
    %c0_i32_1 = arith.constant 0 : i32
    return %arg0, %c0_i32, %c0_i32_0 : i32, i32, i32
  }
}

</mosaic_0001>

<llo_original>
// kernel: tpu_custom_call.1
$region0: #{tpu_custom_call.1}
  #allocation0 [shape = 'u32[]', space=smem, size = 0x4, offset = 0x4, fixed_abs, tag = 'smem constant byte address 0x4 - core index']
  #allocation1 [shape = 'u32[144,128]{1,0:T(1,128)}', space=vmem, size = 0x12000, scoped, tag = 'internal scratch']
  #allocation2 [shape = 's32[1]{0}', space=sflag, size = 0x4, scoped, tag = 'scoped memory for tpu_custom_call.1']
  #allocation3 [shape = 's32[1]{0:T(128)S(6)}', space=smem, size = 0x200, scoped, tag = 'prefetched SMEM operand 0']
  %s0 = inlined_call_operand.<no memory space> [shape: s32[1], index: 0, kind: input, shape index: {}]
  %s1 = inlined_call_operand.vmem [shape: f32[2], index: 1, kind: input, shape index: {}]
  %s2 = inlined_call_operand.vmem [shape: bf16[17,24], index: 2, kind: input, shape index: {}]
  %s3 = inlined_call_operand.vmem [shape: bf16[96,48], index: 3, kind: input, shape index: {}]
  %s4 = inlined_call_operand.hbm [shape: f32[12,24,96], index: 4, kind: input, shape index: {}]
  %s5 = inlined_call_operand.hbm [shape: bf16[8,16,48], index: 5, kind: output, shape index: {}]
  %s6 = sld [smem:[#allocation0]]
  $region57: #{tpu_custom_call.1} parent=0
    _
  %s8 = ssub.s32 1, %s6
  %s9 = scalar_select 0, %s8, %s6
  %10 = sst [smem:[#allocation3]] %s0
  $region1: #{tpu_custom_call.1} parent=0
    #allocation4 [shape = 'u8[512]{0}', space=smem, size = 0x200, scoped, tag = 'input window, operand 1, single buffered']
    #allocation5 [shape = 's32[2]{0}', space=sflag, size = 0x8, scoped, tag = 'scoped memory for tpu_custom_call.1']
    #allocation6 [shape = 's32[2]{0}', space=sflag, size = 0x8, scoped, tag = 'scoped memory for tpu_custom_call.1']
    #allocation7 [shape = 's32[2]{0}', space=sflag, size = 0x8, scoped, tag = 'scoped memory for tpu_custom_call.1']
    #allocation8 [shape = 'u8[24576]{0}', space=vmem, size = 0x6000, scoped, tag = 'input window, operand 4']
    #allocation9 [shape = 'u8[8192]{0}', space=vmem, size = 0x2000, scoped, tag = 'output window, operand 0']
    %11 = vsyncpa [#allocation7], 0
    %12 = vsyncpa [#allocation5], 0
    %s13 = scalar_lea.sflag [#allocation5], 1
    %14 = vsyncpa %s13, 0
    %15 = vsyncpa [#allocation6], 0
    %s16 = scalar_lea.sflag [#allocation6], 1
    %17 = vsyncpa %s16, 0
    loop: start=0, step=1, limit=10
    $region2: #{tpu_custom_call.1} parent=1 // loop_pre_header
      _
    $region3: #{tpu_custom_call.1} parent=1 // loop_header
      %s19 = sphi 0, %s23
      %p20 = scmp.ge.s32.totalorder %s19, 10
      %s27 = sphi 0, %s27
      %s29 = sphi 0, %s27
      %s30 = sphi 0, %s29
      %s44 = sphi 0, %s30
      %s48 = sphi 0, %s48
      %s50 = sphi 0, %s48
      %s51 = sphi 0, %s50
      %s65 = sphi 0, %s51
      %s69 = sphi 0, %s69
      %s71 = sphi 0, %s69
      %s72 = sphi 0, %s71
      %s86 = sphi 0, %s72
      %s96 = sphi 0, %s98
      %s99 = sphi 0, %s96
      %s100 = sphi 0, %s99
      %s116 = sphi 0, %s100
      %s122 = sphi 0, %s124
      %s125 = sphi 0, %s122
      %s126 = sphi 0, %s125
      %s142 = sphi 0, %s126
    $region4: #{tpu_custom_call.1} parent=1 // loop_header_branch
      %22 = sbr.rel (%p20) target = $region8
    $region5: #{tpu_custom_call.1} parent=1 // loop_body
      %s24 = ssub.s32 %s19, 1
      %s25 = ssub.s32 %s19, 2
      %s26 = sadd.s32 %s19, 1
      %s28 = sadd.s32 %s27, 1
      %p31 = scmp.eq.s32.totalorder %s19, 7
      %p32 = scmp.ne.s32.totalorder %s27, %s29
      %p33 = scmp.eq.s32.totalorder %s19, 0
      %p34 = por %p32, %p33
      %p35 = scmp.ne.s32.totalorder %s27, %s29
      %p36 = scmp.eq.s32.totalorder %s24, 7
      %p37 = por %p35, %p36
      %p38 = scmp.ne.s32.totalorder %s29, %s30
      %p39 = scmp.eq.s32.totalorder %s24, 0
      %p40 = por %p38, %p39
      %p41 = scmp.ne.s32.totalorder %s29, %s30
      %p42 = scmp.eq.s32.totalorder %s25, 7
      %p43 = por %p41, %p42
      %p45 = scmp.ne.s32.totalorder %s30, %s44
      %p46 = scmp.eq.s32.totalorder %s25, 0
      %p47 = por %p45, %p46
      %s49 = sadd.s32 %s48, 1
      %p52 = scmp.eq.s32.totalorder %s19, 7
      %p53 = scmp.ne.s32.totalorder %s48, %s50
      %p54 = scmp.eq.s32.totalorder %s19, 0
      %p55 = por %p53, %p54
      %p56 = scmp.ne.s32.totalorder %s48, %s50
      %p57 = scmp.eq.s32.totalorder %s24, 7
      %p58 = por %p56, %p57
      %p59 = scmp.ne.s32.totalorder %s50, %s51
      %p60 = scmp.eq.s32.totalorder %s24, 0
      %p61 = por %p59, %p60
      %p62 = scmp.ne.s32.totalorder %s50, %s51
      %p63 = scmp.eq.s32.totalorder %s25, 7
      %p64 = por %p62, %p63
      %p66 = scmp.ne.s32.totalorder %s51, %s65
      %p67 = scmp.eq.s32.totalorder %s25, 0
      %p68 = por %p66, %p67
      %s70 = sadd.s32 %s69, 1
      %p73 = scmp.eq.s32.totalorder %s19, 7
      %p74 = scmp.ne.s32.totalorder %s69, %s71
      %p75 = scmp.eq.s32.totalorder %s19, 0
      %p76 = por %p74, %p75
      %p77 = scmp.ne.s32.totalorder %s69, %s71
      %p78 = scmp.eq.s32.totalorder %s24, 7
      %p79 = por %p77, %p78
      %p80 = scmp.ne.s32.totalorder %s71, %s72
      %p81 = scmp.eq.s32.totalorder %s24, 0
      %p82 = por %p80, %p81
      %p83 = scmp.ne.s32.totalorder %s71, %s72
      %p84 = scmp.eq.s32.totalorder %s25, 7
      %p85 = por %p83, %p84
      %p87 = scmp.ne.s32.totalorder %s72, %s86
      %p88 = scmp.eq.s32.totalorder %s25, 0
      %p89 = por %p87, %p88
      %s90 = sld [smem:[#allocation3]]
      %s91 = sadd.s32 %s90, %s19
      %s92 = sld [smem:[#allocation3]]
      %s93 = sadd.s32 %s92, %s26
      %s94 = ssub.s32 %s91, %s93
      %p95 = scmp.eq.s32.totalorder %s94, 0
      %s97 = sadd.s32 %s96, 1
      %s98 = scalar_select %p95, %s96, %s97
      %p101 = pneg %p95
      %p102 = scmp.eq.s32.totalorder %s19, 7
      %p103 = por %p101, %p102
      %p104 = scmp.ne.s32.totalorder %s96, %s99
      %p105 = scmp.eq.s32.totalorder %s19, 0
      %p106 = por %p104, %p105
      %p107 = scmp.ne.s32.totalorder %s96, %s99
      %p108 = scmp.eq.s32.totalorder %s24, 7
      %p109 = por %p107, %p108
      %p110 = scmp.ne.s32.totalorder %s99, %s100
      %p111 = scmp.eq.s32.totalorder %s24, 0
      %p112 = por %p110, %p111
      %p113 = scmp.ne.s32.totalorder %s99, %s100
      %p114 = scmp.eq.s32.totalorder %s25, 7
      %p115 = por %p113, %p114
      %p117 = scmp.ne.s32.totalorder %s100, %s116
      %p118 = scmp.eq.s32.totalorder %s25, 0
      %p119 = por %p117, %p118
      %s120 = ssub.s32 %s19, %s26
      %p121 = scmp.eq.s32.totalorder %s120, 0
      %s123 = sadd.s32 %s122, 1
      %s124 = scalar_select %p121, %s122, %s123
      %p127 = pneg %p121
      %p128 = scmp.eq.s32.totalorder %s19, 7
      %p129 = por %p127, %p128
      %p130 = scmp.ne.s32.totalorder %s122, %s125
      %p131 = scmp.eq.s32.totalorder %s19, 0
      %p132 = por %p130, %p131
      %p133 = scmp.ne.s32.totalorder %s122, %s125
      %p134 = scmp.eq.s32.totalorder %s24, 7
      %p135 = por %p133, %p134
      %p136 = scmp.ne.s32.totalorder %s125, %s126
      %p137 = scmp.eq.s32.totalorder %s24, 0
      %p138 = por %p136, %p137
      %p139 = scmp.ne.s32.totalorder %s125, %s126
      %p140 = scmp.eq.s32.totalorder %s25, 7
      %p141 = por %p139, %p140
      %p143 = scmp.ne.s32.totalorder %s126, %s142
      %p144 = scmp.eq.s32.totalorder %s25, 0
      %p145 = por %p143, %p144
      %p146 = scmp.le.s32.totalorder 1, %s19
      %p147 = scmp.lt.s32.totalorder %s19, 9
      %p148 = pnand %p146, %p147
      %p149 = pneg %p148
      // Predicated region
      $region9: #{tpu_custom_call.1} parent=5 // pred_check
        _
      $region10: #{tpu_custom_call.1} parent=5 // pred_check_branch
        %151 = sbr.rel (%p148) target = $region12
      $region11: #{tpu_custom_call.1} parent=5 // pred_region
        %s152 = ssub.s32 %s19, 1
        // Predicated region
        $region13: #{tpu_custom_call.1} parent=11 // pred_check
          %p153 = pneg %p40
        $region14: #{tpu_custom_call.1} parent=11 // pred_check_branch
          %155 = sbr.rel (%p153) target = $region16
        $region15: #{tpu_custom_call.1} parent=11 // pred_region
          %s157 = ssub.s32 16, 16
          %158 = vsyncadd [#allocation7], %s157
          %s160 = sshll.u32 %s1, 4
          %s161 = int_to_ptr.vmem [resolvable:$true] %s160
          %163 = dma.vmem_to_smem %s161, 16, [#allocation4], [#allocation7]
        $region16: #{tpu_custom_call.1} parent=11 // pred_fallthru
          _
        // Predicated region
        $region17: #{tpu_custom_call.1} parent=11 // pred_check
          %p164 = pneg %p61
        $region18: #{tpu_custom_call.1} parent=11 // pred_check_branch
          %166 = sbr.rel (%p164) target = $region20
        $region19: #{tpu_custom_call.1} parent=11 // pred_region
          _
        $region20: #{tpu_custom_call.1} parent=11 // pred_fallthru
          _
        // Predicated region
        $region21: #{tpu_custom_call.1} parent=11 // pred_check
          %p167 = pneg %p82
        $region22: #{tpu_custom_call.1} parent=11 // pred_check_branch
          %169 = sbr.rel (%p167) target = $region24
        $region23: #{tpu_custom_call.1} parent=11 // pred_region
          _
        $region24: #{tpu_custom_call.1} parent=11 // pred_fallthru
          _
      $region12: #{tpu_custom_call.1} parent=5 // pred_fallthru
        _
      %p170 = scmp.lt.s32.totalorder %s19, 8
      // Predicated region
      $region25: #{tpu_custom_call.1} parent=5 // pred_check
        %p171 = pneg %p170
      $region26: #{tpu_custom_call.1} parent=5 // pred_check_branch
        %173 = sbr.rel (%p171) target = $region28
      $region27: #{tpu_custom_call.1} parent=5 // pred_region
        // Predicated region
        $region29: #{tpu_custom_call.1} parent=27 // pred_check
          %p174 = pneg %p106
        $region30: #{tpu_custom_call.1} parent=27 // pred_check_branch
          %176 = sbr.rel (%p174) target = $region32
        $region31: #{tpu_custom_call.1} parent=27 // pred_region
          %s177 = sand.u32 %s96, 1
          %s178 = scalar_lea.sflag [#allocation5], %s177
          %s179 = sand.u32 %s96, 1
          %s180 = smul.addr %s179, 24
          %s181 = scalar_lea.vmem [#allocation8], %s180
          %s182 = sld [smem:[#allocation3]]
          %s183 = sadd.s32 %s182, %s19
          %s185 = ssub.s32 384, 384
          %186 = vsyncadd %s178, %s185
          %s187 = smul.addr %s183, 3
          %s188 = smul.addr %s187, 128
          %s189 = scalar_lea.hbm %s4, %s188
          %s190 = sshll.u32 %s181, 4
          %s191 = int_to_ptr.vmem [resolvable:$true] %s190
          %196 = dma.hbm_to_vmem [thread:$0]  %s189, 384, %s191, %s178, 128, 128, 8
        $region32: #{tpu_custom_call.1} parent=27 // pred_fallthru
          _
      $region28: #{tpu_custom_call.1} parent=5 // pred_fallthru
        _
      %p197 = scmp.le.s32.totalorder 1, %s19
      %p198 = scmp.lt.s32.totalorder %s19, 9
      %p199 = pnand %p197, %p198
      %p200 = pneg %p199
      // Predicated region
      $region33: #{tpu_custom_call.1} parent=5 // pred_check
        _
      $region34: #{tpu_custom_call.1} parent=5 // pred_check_branch
        %202 = sbr.rel (%p199) target = $region36
      $region35: #{tpu_custom_call.1} parent=5 // pred_region
        %s203 = ssub.s32 %s19, 1
        // Predicated region
        $region37: #{tpu_custom_call.1} parent=35 // pred_check
          %p204 = pneg %p40
        $region38: #{tpu_custom_call.1} parent=35 // pred_check_branch
          %206 = sbr.rel (%p204) target = $region40
        $region39: #{tpu_custom_call.1} parent=35 // pred_region
          %207 = dma.done [#allocation7], 16
        $region40: #{tpu_custom_call.1} parent=35 // pred_fallthru
          _
        %s208 = sand.u32 %s99, 1
        %s209 = scalar_lea.sflag [#allocation5], %s208
        %s210 = sand.u32 %s99, 1
        %s211 = smul.addr %s210, 24
        %s212 = scalar_lea.vmem [#allocation8], %s211
        // Predicated region
        $region41: #{tpu_custom_call.1} parent=35 // pred_check
          %p213 = pneg %p112
        $region42: #{tpu_custom_call.1} parent=35 // pred_check_branch
          %215 = sbr.rel (%p213) target = $region44
        $region43: #{tpu_custom_call.1} parent=35 // pred_region
          %216 = dma.done %s209, 384
        $region44: #{tpu_custom_call.1} parent=35 // pred_fallthru
          _
        %217 = sfence
        %p218 = pneg %p40
        %p219 = pneg %p37
        %p220 = pneg %p61
        %p221 = pneg %p58
        %p222 = pneg %p82
        %p223 = pneg %p79
        %s224 = sand.u32 %s99, 1
        %s225 = scalar_lea.sflag [#allocation5], %s224
        %s226 = sand.u32 %s99, 1
        %s227 = smul.addr %s226, 24
        %s228 = scalar_lea.vmem [#allocation8], %s227
        %p229 = pneg %p112
        %p230 = pneg %p109
        %p231 = pneg %p138
        %p232 = pneg %p135
        %s233 = sand.u32 %s125, 1
        %s234 = scalar_lea.sflag [#allocation6], %s233
        %s235 = sand.u32 %s125, 1
        %s236 = smul.addr %s235, 8
        %s237 = scalar_lea.vmem [#allocation9], %s236
        %s238 = sld [smem:[#allocation3]]
        %s239 = sadd.s32 %s238, %s24
        %s241 = sld [smem:[#allocation4]]
        %s242 = sld [smem:[#allocation4 + $0x1]]
        %v243 = vld [vmem:[%s212] sm:$0xff]
        %v244 = vld [vmem:[%s212 + $0x8] sm:$0xff]
        %v245 = vld [vmem:[%s212 + $0x10] sm:$0xff]
        %v246 = vpack.c.bf16 %v244, %v243
        %v247 = vpack.c.bf16 %v245, %v245
        %v248 = vld [vmem:[%s2] sm:$0xf]
        %v249 = vld [vmem:[%s2 + $0x4] sm:$0xf]
        %v250 = vld [vmem:[%s2 + $0x8] sm:$0x1]
        %v254 = vunpack.c.l.b16 %v248
        %v255 = vunpack.c.l.b16 %v249
        %v256 = vunpack.c.l.b16 %v250
        %v257 = vpack.c.b16 %v255, %v254
        %v258 = vpack.c.b16 %v256, %v256
        %vm259 = vcmask 195584
        %v261 = vsel %vm259, %v257, 0
        %v264 = vsel %vm259, %v258, 0
        %vm266 = vcmask 1043456
        %v268 = vsel %vm266, %v247, 0
        %270 = vmatprep.subr.bf16.mxu0 0
        %271 = vmatpush1.bf16.msra.mxu0 0
        %272 = vmatprep.subr.bf16.mxu0 0
        %273 = vmatpush1.bf16.msra.mxu0 0
        %274 = vmatprep.subr.bf16.mxu0 0
        %275 = vmatpush1.bf16.msra.mxu0 0
        %276 = vmatprep.subr.bf16.mxu0 0
        %277 = vmatpush1.bf16.msra.mxu0 0
        %278 = vmatprep.subr.bf16.mxu0 0
        %279 = vmatpush1.bf16.msra.mxu0 0
        %280 = vmatprep.subr.bf16.mxu0 0
        %281 = vmatpush1.bf16.msra.mxu0 0
        %282 = vmatprep.subr.bf16.mxu0 0
        %283 = vmatpush1.bf16.msra.mxu0 %v268
        %284 = vmatprep.subr.bf16.mxu0 0
        %285 = vmatpush1.bf16.msra.mxu0 %v246
        %286 = vmatprep.subr.bf16.mxu0 0
        %287 = vmatpush2.bf16.msra.mxu0 0
        %288 = vmatprep.subr.bf16.mxu0 0
        %289 = vmatpush2.bf16.msra.mxu0 0
        %290 = vmatprep.subr.bf16.mxu0 0
        %291 = vmatpush2.bf16.msra.mxu0 0
        %292 = vmatprep.subr.bf16.mxu0 0
        %293 = vmatpush2.bf16.msra.mxu0 0
        %294 = vmatprep.subr.bf16.mxu0 0
        %295 = vmatpush2.bf16.msra.mxu0 0
        %296 = vmatprep.subr.bf16.mxu0 0
        %297 = vmatpush2.bf16.msra.mxu0 0
        %298 = vmatprep.subr.bf16.mxu0 0
        %299 = vmatpush2.bf16.msra.mxu0 0
        %300 = vmatprep.subr.bf16.mxu0 0
        %301 = vmatpush2.bf16.msra.mxu0 0
        %302 = vmatprep.mubr.bf16.mxu0 0
        %303 = vmatmul.mubr.bf16.gmra.mxu0 %v261
        %v304 = vpop.f32.mrf.mxu0
        %v305 = vadd.f32 0.0, %v304
        %v306 = vpop.f32.mrf.mxu0
        %v307 = vpop.f32.mrf.mxu0
        %v308 = vadd.f32 0.0, %v307
        %v309 = vpop.f32.mrf.mxu0
        %310 = vmatprep.mubr.bf16.mxu0 0
        %311 = vmatmul.mubr.bf16.gmra.mxu0 %v264
        %v312 = vpop.f32.mrf.mxu0
        %v313 = vadd.f32 0.0, %v312
        %v314 = vpop.f32.mrf.mxu0
        %v315 = vpop.f32.mrf.mxu0
        %v316 = vpop.f32.mrf.mxu0
        %317 = vdwg.mxu0
        %v318 = vpack.c.bf16 %v308, %v305
        %v319 = vpack.c.bf16 %v313, %v313
        %v320 = vld [vmem:[%s3] sm:$0xf]
        %v321 = vld [vmem:[%s3 + $0x4] sm:$0xf]
        %v322 = vld [vmem:[%s3 + $0x8] sm:$0xf]
        %v323 = vld [vmem:[%s3 + $0xc] sm:$0xf]
        %v324 = vld [vmem:[%s3 + $0x10] sm:$0xf]
        %v325 = vld [vmem:[%s3 + $0x14] sm:$0xf]
        %v326 = vld [vmem:[%s3 + $0x18] sm:$0xf]
        %v327 = vld [vmem:[%s3 + $0x1c] sm:$0xf]
        %v328 = vld [vmem:[%s3 + $0x20] sm:$0xf]
        %v329 = vld [vmem:[%s3 + $0x24] sm:$0xf]
        %v330 = vld [vmem:[%s3 + $0x28] sm:$0xf]
        %v331 = vld [vmem:[%s3 + $0x2c] sm:$0xf]
        %v344 = vunpack.c.l.b16 %v320
        %v345 = vunpack.c.l.b16 %v321
        %v346 = vunpack.c.l.b16 %v322
        %v347 = vunpack.c.l.b16 %v323
        %v348 = vunpack.c.l.b16 %v324
        %v349 = vunpack.c.l.b16 %v325
        %v350 = vunpack.c.l.b16 %v326
        %v351 = vunpack.c.l.b16 %v327
        %v352 = vunpack.c.l.b16 %v328
        %v353 = vunpack.c.l.b16 %v329
        %v354 = vunpack.c.l.b16 %v330
        %v355 = vunpack.c.l.b16 %v331
        %v356 = vpack.c.b16 %v345, %v344
        %v357 = vpack.c.b16 %v347, %v346
        %v358 = vpack.c.b16 %v349, %v348
        %v359 = vpack.c.b16 %v351, %v350
        %v360 = vpack.c.b16 %v353, %v352
        %v361 = vpack.c.b16 %v355, %v354
        %vm368 = vcmask 785408
        %v370 = vsel %vm368, %v318, 0
        %v373 = vsel %vm368, %v319, 0
        %375 = vmatprep.subr.bf16.mxu0 0
        %376 = vmatpush1.bf16.msra.mxu0 0
        %377 = vmatprep.subr.bf16.mxu0 0
        %378 = vmatpush1.bf16.msra.mxu0 0
        %379 = vmatprep.subr.bf16.mxu0 0
        %380 = vmatpush1.bf16.msra.mxu0 %v361
        %381 = vmatprep.subr.bf16.mxu0 0
        %382 = vmatpush1.bf16.msra.mxu0 %v360
        %383 = vmatprep.subr.bf16.mxu0 0
        %384 = vmatpush1.bf16.msra.mxu0 %v359
        %385 = vmatprep.subr.bf16.mxu0 0
        %386 = vmatpush1.bf16.msra.mxu0 %v358
        %387 = vmatprep.subr.bf16.mxu0 0
        %388 = vmatpush1.bf16.msra.mxu0 %v357
        %389 = vmatprep.subr.bf16.mxu0 0
        %390 = vmatpush1.bf16.msra.mxu0 %v356
        %391 = vmatprep.subr.bf16.mxu0 0
        %392 = vmatpush2.bf16.msra.mxu0 0
        %393 = vmatprep.subr.bf16.mxu0 0
        %394 = vmatpush2.bf16.msra.mxu0 0
        %395 = vmatprep.subr.bf16.mxu0 0
        %396 = vmatpush2.bf16.msra.mxu0 0
        %397 = vmatprep.subr.bf16.mxu0 0
        %398 = vmatpush2.bf16.msra.mxu0 0
        %399 = vmatprep.subr.bf16.mxu0 0
        %400 = vmatpush2.bf16.msra.mxu0 0
        %401 = vmatprep.subr.bf16.mxu0 0
        %402 = vmatpush2.bf16.msra.mxu0 0
        %403 = vmatprep.subr.bf16.mxu0 0
        %404 = vmatpush2.bf16.msra.mxu0 0
        %405 = vmatprep.subr.bf16.mxu0 0
        %406 = vmatpush2.bf16.msra.mxu0 0
        %407 = vmatprep.mubr.bf16.mxu0 0
        %408 = vmatmul.mubr.bf16.gmra.mxu0 %v370
        %v409 = vpop.f32.mrf.mxu0
        %v410 = vadd.f32 0.0, %v409
        %v411 = vpop.f32.mrf.mxu0
        %v412 = vpop.f32.mrf.mxu0
        %v413 = vadd.f32 0.0, %v412
        %v414 = vpop.f32.mrf.mxu0
        %415 = vmatprep.mubr.bf16.mxu0 0
        %416 = vmatmul.mubr.bf16.gmra.mxu0 %v373
        %v417 = vpop.f32.mrf.mxu0
        %v418 = vadd.f32 0.0, %v417
        %v419 = vpop.f32.mrf.mxu0
        %v420 = vpop.f32.mrf.mxu0
        %v421 = vpop.f32.mrf.mxu0
        %422 = vdwg.mxu0
        %vm423 = vcmask 385024
        %v424 = vsel %vm423, %v418, 0.0
        %425 = vadd.xlane.f32.xlu0 %v424
        %v426 = vpop.xlane.xlu0 %425
        %s427 = vtos %v426
        %s428 = smul.f32 %s427, 0.0013020834
        %s429 = smul.f32 %s428, %s241
        %s430 = sadd.f32 %s429, %s242
        %v431 = vstv %s430
        %v432 = vadd.f32 %v410, %v431
        %v433 = vadd.f32 %v413, %v431
        %v434 = vmax.f32 %v432, 0.0
        %v435 = vmax.f32 %v433, 0.0
        %v436 = vmin.f32 %v434, 1.0
        %v437 = vmin.f32 %v435, 1.0
        %v438 = vpack.c.bf16 %v437, %v436
        %v440 = vunpack.c.l.b16 %v438
        %v441 = vunpack.c.h.b16 %v438
        %v442 = vpack.c.b16 %v440, %v440
        %v443 = vpack.c.b16 %v441, %v441
        %vm446 = vcmask 388096
        %447 = vst.msk [vmem:[%s237] sm:$0xf] %vm446, %v442
        %448 = vst.msk [vmem:[%s237 + $0x4] sm:$0xf] %vm446, %v443
        %s449 = sand.u32 %s125, 1
        %s450 = scalar_lea.sflag [#allocation6], %s449
        %s451 = sand.u32 %s125, 1
        %s452 = smul.addr %s451, 8
        %s453 = scalar_lea.vmem [#allocation9], %s452
        // Predicated region
        $region45: #{tpu_custom_call.1} parent=35 // pred_check
          %p454 = pneg %p135
        $region46: #{tpu_custom_call.1} parent=35 // pred_check_branch
          %456 = sbr.rel (%p454) target = $region48
        $region47: #{tpu_custom_call.1} parent=35 // pred_region
          %s458 = ssub.s32 128, 128
          %459 = vsyncadd %s450, %s458
          %s460 = smul.addr %s24, 2
          %s461 = smul.addr %s460, 64
          %s462 = scalar_lea.hbm %s5, %s461
          %s463 = sshll.u32 %s453, 4
          %s464 = int_to_ptr.vmem [resolvable:$true] %s463
          %469 = dma.vmem_to_hbm [thread:$0]  %s464, 128, %s462, %s450, 64, 64, 4
        $region48: #{tpu_custom_call.1} parent=35 // pred_fallthru
          _
      $region36: #{tpu_custom_call.1} parent=5 // pred_fallthru
        _
      %p470 = scmp.le.s32.totalorder 2, %s19
      // Predicated region
      $region49: #{tpu_custom_call.1} parent=5 // pred_check
        %p471 = pneg %p470
      $region50: #{tpu_custom_call.1} parent=5 // pred_check_branch
        %473 = sbr.rel (%p471) target = $region52
      $region51: #{tpu_custom_call.1} parent=5 // pred_region
        %s474 = ssub.s32 %s19, 2
        // Predicated region
        $region53: #{tpu_custom_call.1} parent=51 // pred_check
          %p475 = pneg %p141
        $region54: #{tpu_custom_call.1} parent=51 // pred_check_branch
          %477 = sbr.rel (%p475) target = $region56
        $region55: #{tpu_custom_call.1} parent=51 // pred_region
          %s478 = sand.u32 %s126, 1
          %s479 = scalar_lea.sflag [#allocation6], %s478
          %s480 = sand.u32 %s126, 1
          %s481 = smul.addr %s480, 8
          %s482 = scalar_lea.vmem [#allocation9], %s481
          %483 = dma.done %s479, 128
        $region56: #{tpu_custom_call.1} parent=51 // pred_fallthru
          _
      $region52: #{tpu_custom_call.1} parent=5 // pred_fallthru
        _
    $region6: #{tpu_custom_call.1} parent=1 // loop_footer
      %s23 = sadd.s32 1, %s19
    $region7: #{tpu_custom_call.1} parent=1 // loop_footer_branch
      %18 = sbr.rel target = $region3
    $region8: #{tpu_custom_call.1} parent=1 // loop_exit
      _
    %484 = vsyncpa [#allocation5], 1
    %s485 = scalar_lea.sflag [#allocation5], 1
    %486 = vsyncpa %s485, 1
    %487 = vsyncpa [#allocation6], 1
    %s488 = scalar_lea.sflag [#allocation6], 1
    %489 = vsyncpa %s488, 1
    %490 = vsyncpa [#allocation7], 1
    %s491 = scalar_lea.sflag [#allocation7], 1
    %492 = vsyncpa %s491, 1

</llo_original>
